<compile_context>
chip_gen: v6e
topology: v6e:2x2x1
jax: 0.10.0
libtpu: 0.0.40
codegen_flags: <defaults>
</compile_context>

<pallas_src>
import jax
import jax.numpy as jnp
from jax.experimental import pallas as pl
from jax.experimental.pallas import tpu as pltpu

N_L2, W_L2 = 26, 80                      # 26 chunks of width 80 -> neuron_l2
N_L1, W_L1 = 24, 16                      # 24 chunks of width 16 -> neuron_l1
N_CHUNKS = N_L2 + N_L1                   # 50
IN_WIDTH = N_L2 * W_L2 + N_L1 * W_L1     # 2464
K_AUG = W_L2 + W_L1 + 2                  # 98 = 80 + 16 + 2 bias-selector cols
ROW_TILE = 1024                          # rows of X_aug per grid step (mult. of 8)


def _embedder_kernel(x_ref, w_ref, o_ref):
    # x_ref: [row_tile, 98], w_ref: [98, D], o_ref: [row_tile, D]
    # Single 2D MXU matmul; bias is folded into the last two rows of w_ref.
    o_ref[...] = jnp.dot(x_ref[...], w_ref[...],
                         preferred_element_type=jnp.float32).astype(o_ref.dtype)


def _build_augmented_input(v):
    """[B, 2464] -> block-diagonal + bias-selector layout [B*50, 98]."""
    B = v.shape[0]
    dt = v.dtype
    x2 = v[:, : N_L2 * W_L2].reshape(B, N_L2, W_L2)        # (B, 26, 80)
    x1 = v[:, N_L2 * W_L2:].reshape(B, N_L1, W_L1)         # (B, 24, 16)
    # l2 rows: [chunk80 | 0_16 | 1 | 0]
    x2a = jnp.concatenate(
        [x2,
         jnp.zeros((B, N_L2, W_L1), dt),
         jnp.broadcast_to(jnp.asarray([1.0, 0.0], dt), (B, N_L2, 2))],
        axis=-1)
    # l1 rows: [0_80 | chunk16 | 0 | 1]
    x1a = jnp.concatenate(
        [jnp.zeros((B, N_L1, W_L2), dt),
         x1,
         jnp.broadcast_to(jnp.asarray([0.0, 1.0], dt), (B, N_L1, 2))],
        axis=-1)
    # Rows land in the exact PyTorch stack order: 26 l2 rows then 24 l1 rows per batch.
    return jnp.concatenate([x2a, x1a], axis=1).reshape(B * N_CHUNKS, K_AUG)


def embedder_neuron_group(v, w1, b1, w2, b2, d_model):
    """v: [B, 2464]; w1: [16, D]; b1: [D]; w2: [80, D]; b2: [D] -> [B, 50, D]."""
    B = v.shape[0]
    assert v.shape[1] == IN_WIDTH

    x_aug = _build_augmented_input(v)                                # (B*50, 98)
    w_aug = jnp.concatenate([w2, w1, b2[None, :], b1[None, :]], 0)   # (98, D)

    total_rows = B * N_CHUNKS
    row_tile = ROW_TILE if total_rows >= ROW_TILE else total_rows
    grid = (pl.cdiv(total_rows, row_tile),)

    # TODO(synk): with d_model=32 the output stores are lane-masked (32/128 lanes);
    # if d_model is tunable or a downstream projection exists, fuse it here.
    out_flat = pl.pallas_call(
        _embedder_kernel,
        out_shape=jax.ShapeDtypeStruct((total_rows, d_model), jnp.float32),
        grid=grid,
        in_specs=[
            pl.BlockSpec((row_tile, K_AUG), lambda i: (i, 0)),   # activation stream
            pl.BlockSpec((K_AUG, d_model), lambda i: (0, 0)),    # weights: VMEM-resident
        ],
        out_specs=pl.BlockSpec((row_tile, d_model), lambda i: (i, 0)),
        compiler_params=pltpu.CompilerParams(
            dimension_semantics=("parallel",)),                  # megacore on v7x
    )(x_aug, w_aug)

    # Free reshape: rows are already in final stack order.
    return out_flat.reshape(B, N_CHUNKS, d_model)


def _init_linear(key, fan_in, d_model):
    # Deterministic init mimicking PyTorch nn.Linear default (uniform +-1/sqrt(fan_in)).
    kw, kb = jax.random.split(key)
    bound = 1.0 / jnp.sqrt(jnp.float32(fan_in))
    w = jax.random.uniform(kw, (fan_in, d_model), jnp.float32, -bound, bound)
    b = jax.random.uniform(kb, (d_model,), jnp.float32, -bound, bound)
    return w, b


if __name__ == "__main__":
    d_model = 32
    B = 2

    key = jax.random.PRNGKey(0)
    k_x, k_l1, k_l2 = jax.random.split(key, 3)

    v = jax.random.normal(k_x, (B, IN_WIDTH), jnp.float32)       # [2, 2464]
    w1, b1 = _init_linear(k_l1, W_L1, d_model)   # neuron_l1: Linear(16, d_model)
    w2, b2 = _init_linear(k_l2, W_L2, d_model)   # neuron_l2: Linear(80, d_model)

    fwd = jax.jit(embedder_neuron_group, static_argnums=5)
    out = fwd(v, w1, b1, w2, b2, d_model)
    out = jax.block_until_ready(out)

    # Pure-JAX reference of the PyTorch semantics (26 l2 chunks then 24 l1 chunks).
    ref2 = v[:, : N_L2 * W_L2].reshape(B, N_L2, W_L2) @ w2 + b2
    ref1 = v[:, N_L2 * W_L2:].reshape(B, N_L1, W_L1) @ w1 + b1
    ref = jnp.concatenate([ref2, ref1], axis=1)

    assert out.shape == (B, N_CHUNKS, d_model)
    assert jnp.allclose(out, ref, atol=1e-5, rtol=1e-5), \
        float(jnp.max(jnp.abs(out - ref)))

    print("KERNEL_OK")
</pallas_src>

<mosaic_0001>
module attributes {stable_mosaic.version = 11 : i64} {
  func.func @_embedder_kernel(%arg0: i32, %arg1: memref<100x98xf32, #tpu.memory_space<vmem>>, %arg2: memref<98x32xf32, #tpu.memory_space<vmem>>, %arg3: memref<100x32xf32, #tpu.memory_space<vmem>>) attributes {dimension_semantics = [#tpu.dimension_semantics<parallel>], iteration_bounds = array<i64: 1>, scalar_prefetch = 0 : i64, scratch_operands = 0 : i64, tpu.core_type = #tpu.core_type<tc>, window_params = [{transform_indices = @transform_0, window_bounds = array<i64: 100, 98>}, {pipeline_mode = #tpu.pipeline_mode<synchronous>, transform_indices = @transform_1, window_bounds = array<i64: 98, 32>}, {transform_indices = @transform_2, window_bounds = array<i64: 100, 32>}]} {
    %c0 = arith.constant 0 : index
    %c0_0 = arith.constant 0 : index
    %0 = vector.load %arg1[%c0, %c0_0] : memref<100x98xf32, #tpu.memory_space<vmem>>, vector<100x98xf32>
    %c0_1 = arith.constant 0 : index
    %c0_2 = arith.constant 0 : index
    %1 = vector.load %arg2[%c0_1, %c0_2] : memref<98x32xf32, #tpu.memory_space<vmem>>, vector<98x32xf32>
    %cst = arith.constant dense<0.000000e+00> : vector<100x32xf32>
    %2 = tpu.matmul %0, %1, %cst {dimension_numbers = #tpu.dot_dimension_numbers<[1], [0], [0], [1], [0, 0, 1, 1], [], []>} : vector<100x98xf32>, vector<98x32xf32>, vector<100x32xf32> -> vector<100x32xf32>
    %c0_3 = arith.constant 0 : index
    %c0_4 = arith.constant 0 : index
    %3 = vector.load %arg3[%c0_3, %c0_4] : memref<100x32xf32, #tpu.memory_space<vmem>>, vector<100x32xf32>
    tpu.vector_store %arg3[%c0_3, %c0_4], %2 {strides = array<i32>} : memref<100x32xf32, #tpu.memory_space<vmem>>, vector<100x32xf32>,
    return
  }
  func.func @transform_0(%arg0: i32) -> (i32, i32) {
    %c0_i32 = arith.constant 0 : i32
    %c0_i32_0 = arith.constant 0 : i32
    return %arg0, %c0_i32 : i32, i32
  }
  func.func @transform_1(%arg0: i32) -> (i32, i32) {
    %c0_i32 = arith.constant 0 : i32
    %c0_i32_0 = arith.constant 0 : i32
    %c0_i32_1 = arith.constant 0 : i32
    return %c0_i32, %c0_i32_0 : i32, i32
  }
  func.func @transform_2(%arg0: i32) -> (i32, i32) {
    %c0_i32 = arith.constant 0 : i32
    %c0_i32_0 = arith.constant 0 : i32
    return %arg0, %c0_i32 : i32, i32
  }
}

</mosaic_0001>

<llo_original>
// kernel: embedder_neuron_group.1
$region0: #{embedder_neuron_group.1}
  #allocation0 [shape = 'u32[]', space=smem, size = 0x4, offset = 0x4, fixed_abs, tag = 'smem constant byte address 0x4 - core index']
  #allocation1 [shape = 'u32[144,128]{1,0:T(1,128)}', space=vmem, size = 0x12000, scoped, tag = 'internal scratch']
  %s0 = inlined_call_operand.vmem [shape: f32[100,98], index: 0, kind: input, shape index: {}]
  %s1 = inlined_call_operand.vmem [shape: f32[98,32], index: 1, kind: input, shape index: {}]
  %s2 = inlined_call_operand.vmem [shape: f32[100,32], index: 2, kind: output, shape index: {}]
  %s3 = sld [smem:[#allocation0]]
  $region18: #{embedder_neuron_group.1} parent=0
    _
  %s5 = ssub.s32 1, %s3
  %s6 = scalar_select 0, %s5, %s3
  // Predicated region
  $region2: #{embedder_neuron_group.1} parent=0 // pred_check
    _
  $region3: #{embedder_neuron_group.1} parent=0 // pred_check_branch
    %8 = sbr.rel (0) target = $region5
  $region4: #{embedder_neuron_group.1} parent=0 // pred_region
    _
  $region5: #{embedder_neuron_group.1} parent=0 // pred_fallthru
    _
  // Predicated region
  $region6: #{embedder_neuron_group.1} parent=0 // pred_check
    _
  $region7: #{embedder_neuron_group.1} parent=0 // pred_check_branch
    %10 = sbr.rel (0) target = $region9
  $region8: #{embedder_neuron_group.1} parent=0 // pred_region
    _
  $region9: #{embedder_neuron_group.1} parent=0 // pred_fallthru
    _
  %v11 = vld [vmem:[%s0] sm:$0xff]
  %v12 = vld [vmem:[%s0 + $0x8] sm:$0xff]
  %v13 = vld [vmem:[%s0 + $0x10] sm:$0xff]
  %v14 = vld [vmem:[%s0 + $0x18] sm:$0xff]
  %v15 = vld [vmem:[%s0 + $0x20] sm:$0xff]
  %v16 = vld [vmem:[%s0 + $0x28] sm:$0xff]
  %v17 = vld [vmem:[%s0 + $0x30] sm:$0xff]
  %v18 = vld [vmem:[%s0 + $0x38] sm:$0xff]
  %v19 = vld [vmem:[%s0 + $0x40] sm:$0xff]
  %v20 = vld [vmem:[%s0 + $0x48] sm:$0xff]
  %v21 = vld [vmem:[%s0 + $0x50] sm:$0xff]
  %v22 = vld [vmem:[%s0 + $0x58] sm:$0xff]
  %v23 = vld [vmem:[%s0 + $0x60] sm:$0xf]
  %v24 = vld [vmem:[%s1] sm:$0xff]
  %v25 = vld [vmem:[%s1 + $0x8] sm:$0xff]
  %v26 = vld [vmem:[%s1 + $0x10] sm:$0xff]
  %v27 = vld [vmem:[%s1 + $0x18] sm:$0xff]
  %v28 = vld [vmem:[%s1 + $0x20] sm:$0xff]
  %v29 = vld [vmem:[%s1 + $0x28] sm:$0xff]
  %v30 = vld [vmem:[%s1 + $0x30] sm:$0xff]
  %v31 = vld [vmem:[%s1 + $0x38] sm:$0xff]
  %v32 = vld [vmem:[%s1 + $0x40] sm:$0xff]
  %v33 = vld [vmem:[%s1 + $0x48] sm:$0xff]
  %v34 = vld [vmem:[%s1 + $0x50] sm:$0xff]
  %v35 = vld [vmem:[%s1 + $0x58] sm:$0xff]
  %v36 = vld [vmem:[%s1 + $0x60] sm:$0x3]
  %vm37 = vcmask 801792
  %v39 = vsel %vm37, %v11, 0
  %v42 = vsel %vm37, %v12, 0
  %v45 = vsel %vm37, %v13, 0
  %v48 = vsel %vm37, %v14, 0
  %v51 = vsel %vm37, %v15, 0
  %v54 = vsel %vm37, %v16, 0
  %v57 = vsel %vm37, %v17, 0
  %v60 = vsel %vm37, %v18, 0
  %v63 = vsel %vm37, %v19, 0
  %v66 = vsel %vm37, %v20, 0
  %v69 = vsel %vm37, %v21, 0
  %v72 = vsel %vm37, %v22, 0
  %v75 = vsel %vm37, %v23, 0
  %vm77 = vcmask 1041408
  %v79 = vsel %vm77, %v36, 0
  %81 = vmatprep.subr.mxu0 0.0
  %82 = vmatpush1.msra.mxu0 0.0
  %83 = vmatprep.subr.mxu0 0.0
  %84 = vmatpush1.msra.mxu0 0.0
  %85 = vmatprep.subr.mxu0 0.0
  %86 = vmatpush1.msra.mxu0 0.0
  %87 = vmatprep.subr.mxu0 0.0
  %88 = vmatpush1.msra.mxu0 %v79
  %89 = vmatprep.subr.mxu0 0.0
  %90 = vmatpush1.msra.mxu0 %v35
  %91 = vmatprep.subr.mxu0 0.0
  %92 = vmatpush1.msra.mxu0 %v34
  %93 = vmatprep.subr.mxu0 0.0
  %94 = vmatpush1.msra.mxu0 %v33
  %95 = vmatprep.subr.mxu0 0.0
  %96 = vmatpush1.msra.mxu0 %v32
  %97 = vmatprep.subr.mxu0 0.0
  %98 = vmatpush1.msra.mxu0 %v31
  %99 = vmatprep.subr.mxu0 0.0
  %100 = vmatpush1.msra.mxu0 %v30
  %101 = vmatprep.subr.mxu0 0.0
  %102 = vmatpush1.msra.mxu0 %v29
  %103 = vmatprep.subr.mxu0 0.0
  %104 = vmatpush1.msra.mxu0 %v28
  %105 = vmatprep.subr.mxu0 0.0
  %106 = vmatpush1.msra.mxu0 %v27
  %107 = vmatprep.subr.mxu0 0.0
  %108 = vmatpush1.msra.mxu0 %v26
  %109 = vmatprep.subr.mxu0 0.0
  %110 = vmatpush1.msra.mxu0 %v25
  %111 = vmatprep.subr.mxu0 0.0
  %112 = vmatpush1.msra.mxu0 %v24
  %113 = vmatprep.subr.mxu0 0.0
  %114 = vmatpush2.msra.mxu0 0.0
  %115 = vmatprep.subr.mxu0 0.0
  %116 = vmatpush2.msra.mxu0 0.0
  %117 = vmatprep.subr.mxu0 0.0
  %118 = vmatpush2.msra.mxu0 0.0
  %119 = vmatprep.subr.mxu0 0.0
  %120 = vmatpush2.msra.mxu0 0.0
  %121 = vmatprep.subr.mxu0 0.0
  %122 = vmatpush2.msra.mxu0 0.0
  %123 = vmatprep.subr.mxu0 0.0
  %124 = vmatpush2.msra.mxu0 0.0
  %125 = vmatprep.subr.mxu0 0.0
  %126 = vmatpush2.msra.mxu0 0.0
  %127 = vmatprep.subr.mxu0 0.0
  %128 = vmatpush2.msra.mxu0 0.0
  %129 = vmatprep.subr.mxu0 0.0
  %130 = vmatpush2.msra.mxu0 0.0
  %131 = vmatprep.subr.mxu0 0.0
  %132 = vmatpush2.msra.mxu0 0.0
  %133 = vmatprep.subr.mxu0 0.0
  %134 = vmatpush2.msra.mxu0 0.0
  %135 = vmatprep.subr.mxu0 0.0
  %136 = vmatpush2.msra.mxu0 0.0
  %137 = vmatprep.subr.mxu0 0.0
  %138 = vmatpush2.msra.mxu0 0.0
  %139 = vmatprep.subr.mxu0 0.0
  %140 = vmatpush2.msra.mxu0 0.0
  %141 = vmatprep.subr.mxu0 0.0
  %142 = vmatpush2.msra.mxu0 0.0
  %143 = vmatprep.subr.mxu0 0.0
  %144 = vmatpush2.msra.mxu0 0.0
  %145 = vmatprep.mubr.f32.mxu0 0.0
  %146 = vmatmul.mubr.f32.gmra.mxu0 %v39
  %v147 = vpop.f32.mrf.mxu0
  %v148 = vadd.f32 0.0, %v147
  %v149 = vpop.f32.mrf.mxu0
  %150 = vmatprep.mubr.f32.mxu0 0.0
  %151 = vmatmul.mubr.f32.gmra.mxu0 %v42
  %v152 = vpop.f32.mrf.mxu0
  %v153 = vadd.f32 0.0, %v152
  %v154 = vpop.f32.mrf.mxu0
  %155 = vmatprep.mubr.f32.mxu0 0.0
  %156 = vmatmul.mubr.f32.gmra.mxu0 %v45
  %v157 = vpop.f32.mrf.mxu0
  %v158 = vadd.f32 0.0, %v157
  %v159 = vpop.f32.mrf.mxu0
  %160 = vmatprep.mubr.f32.mxu0 0.0
  %161 = vmatmul.mubr.f32.gmra.mxu0 %v48
  %v162 = vpop.f32.mrf.mxu0
  %v163 = vadd.f32 0.0, %v162
  %v164 = vpop.f32.mrf.mxu0
  %165 = vmatprep.mubr.f32.mxu0 0.0
  %166 = vmatmul.mubr.f32.gmra.mxu0 %v51
  %v167 = vpop.f32.mrf.mxu0
  %v168 = vadd.f32 0.0, %v167
  %v169 = vpop.f32.mrf.mxu0
  %170 = vmatprep.mubr.f32.mxu0 0.0
  %171 = vmatmul.mubr.f32.gmra.mxu0 %v54
  %v172 = vpop.f32.mrf.mxu0
  %v173 = vadd.f32 0.0, %v172
  %v174 = vpop.f32.mrf.mxu0
  %175 = vmatprep.mubr.f32.mxu0 0.0
  %176 = vmatmul.mubr.f32.gmra.mxu0 %v57
  %v177 = vpop.f32.mrf.mxu0
  %v178 = vadd.f32 0.0, %v177
  %v179 = vpop.f32.mrf.mxu0
  %180 = vmatprep.mubr.f32.mxu0 0.0
  %181 = vmatmul.mubr.f32.gmra.mxu0 %v60
  %v182 = vpop.f32.mrf.mxu0
  %v183 = vadd.f32 0.0, %v182
  %v184 = vpop.f32.mrf.mxu0
  %185 = vmatprep.mubr.f32.mxu0 0.0
  %186 = vmatmul.mubr.f32.gmra.mxu0 %v63
  %v187 = vpop.f32.mrf.mxu0
  %v188 = vadd.f32 0.0, %v187
  %v189 = vpop.f32.mrf.mxu0
  %190 = vmatprep.mubr.f32.mxu0 0.0
  %191 = vmatmul.mubr.f32.gmra.mxu0 %v66
  %v192 = vpop.f32.mrf.mxu0
  %v193 = vadd.f32 0.0, %v192
  %v194 = vpop.f32.mrf.mxu0
  %195 = vmatprep.mubr.f32.mxu0 0.0
  %196 = vmatmul.mubr.f32.gmra.mxu0 %v69
  %v197 = vpop.f32.mrf.mxu0
  %v198 = vadd.f32 0.0, %v197
  %v199 = vpop.f32.mrf.mxu0
  %200 = vmatprep.mubr.f32.mxu0 0.0
  %201 = vmatmul.mubr.f32.gmra.mxu0 %v72
  %v202 = vpop.f32.mrf.mxu0
  %v203 = vadd.f32 0.0, %v202
  %v204 = vpop.f32.mrf.mxu0
  %205 = vmatprep.mubr.f32.mxu0 0.0
  %206 = vmatmul.mubr.f32.gmra.mxu0 %v75
  %v207 = vpop.f32.mrf.mxu0
  %v208 = vadd.f32 0.0, %v207
  %v209 = vpop.f32.mrf.mxu0
  %210 = vdwg.mxu0
  %vm211 = vcmask 261120
  %212 = vst.msk [vmem:[%s2] sm:$0xff] %vm211, %v148
  %213 = vst.msk [vmem:[%s2 + $0x8] sm:$0xff] %vm211, %v153
  %214 = vst.msk [vmem:[%s2 + $0x10] sm:$0xff] %vm211, %v158
  %215 = vst.msk [vmem:[%s2 + $0x18] sm:$0xff] %vm211, %v163
  %216 = vst.msk [vmem:[%s2 + $0x20] sm:$0xff] %vm211, %v168
  %217 = vst.msk [vmem:[%s2 + $0x28] sm:$0xff] %vm211, %v173
  %218 = vst.msk [vmem:[%s2 + $0x30] sm:$0xff] %vm211, %v178
  %219 = vst.msk [vmem:[%s2 + $0x38] sm:$0xff] %vm211, %v183
  %220 = vst.msk [vmem:[%s2 + $0x40] sm:$0xff] %vm211, %v188
  %221 = vst.msk [vmem:[%s2 + $0x48] sm:$0xff] %vm211, %v193
  %222 = vst.msk [vmem:[%s2 + $0x50] sm:$0xff] %vm211, %v198
  %223 = vst.msk [vmem:[%s2 + $0x58] sm:$0xff] %vm211, %v203
  %vm224 = vcmask 257024
  %225 = vst.msk [vmem:[%s2 + $0x60] sm:$0xf] %vm224, %v208
  // Predicated region
  $region10: #{embedder_neuron_group.1} parent=0 // pred_check
    _
  $region11: #{embedder_neuron_group.1} parent=0 // pred_check_branch
    %227 = sbr.rel (0) target = $region13
  $region12: #{embedder_neuron_group.1} parent=0 // pred_region
    _
  $region13: #{embedder_neuron_group.1} parent=0 // pred_fallthru
    _
  // Predicated region
  $region14: #{embedder_neuron_group.1} parent=0 // pred_check
    _
  $region15: #{embedder_neuron_group.1} parent=0 // pred_check_branch
    %229 = sbr.rel (0) target = $region17
  $region16: #{embedder_neuron_group.1} parent=0 // pred_region
    _
  $region17: #{embedder_neuron_group.1} parent=0 // pred_fallthru
    _

</llo_original>
